<compile_context>
chip_gen: v6e
topology: v6e:2x2x1
jax: 0.10.0
libtpu: 0.0.40
codegen_flags: <defaults>
</compile_context>

<pallas_src>
import jax
import jax.numpy as jnp
from jax.experimental import pallas as pl
from jax.experimental.pallas import tpu as pltpu


def _num_tensorcores() -> int:
    """Best-effort TensorCores-per-chip query (v5e/v6e: 1, v7x: 2)."""
    try:
        info = pltpu.get_tpu_info()
        for attr in ("num_cores", "tensorcores_per_chip", "num_tensorcores",
                     "cores_per_chip", "core_count"):
            v = getattr(info, attr, None)
            if isinstance(v, int) and v > 0:
                return v
    except Exception:
        pass
    try:
        kind = jax.devices()[0].device_kind.lower()
        if "7" in kind:  # v7x family: 2 TensorCores per chip
            return 2
    except Exception:
        pass
    return 1


def _se_gate_conv1x1_kernel(g_ref, x_ref, w_ref, o_ref):
    # g_ref: (1, C_in)           gate logits, lane-dense (~3 vregs at C_in=320)
    # x_ref: (C_in, HW)          flattened NCHW activations, one batch element
    # w_ref: (C_out_tile, C_in)  slab of the 1x1 conv weight
    # o_ref: (C_out_tile, HW)
    #
    # Fold the SE gate into the weight:  W @ (g ⊙ X) == (W ⊙ gᵀ) @ X.
    # The sigmoid runs on the EUP in f32 over only C_in values, the broadcast
    # multiply is C_out_tile x C_in (instead of C_in x HW when gating X), and
    # no grid step / TensorCore ever re-gates the full activation tensor.
    gate = jax.nn.sigmoid(g_ref[...].astype(jnp.float32)).astype(w_ref.dtype)
    w_scaled = w_ref[...] * gate                               # (C_out_tile, C_in)
    o_ref[...] = jnp.dot(
        w_scaled, x_ref[...], preferred_element_type=jnp.float32
    ).astype(o_ref.dtype)


def sigmoid_mul_conv1x1(x179, x175, weight):
    """Equivalent of: conv2d_1x1(sigmoid(x179) * x175), bias=False.

    x179:   (N, C_in, 1, 1)     gate logits (NCHW)
    x175:   (N, C_in, H, W)     activations (NCHW)
    weight: (C_out, C_in, 1, 1) PyTorch conv weight layout
    returns (N, C_out, H, W)    NCHW
    """
    N, C_in, H, W = x175.shape
    C_out = weight.shape[0]
    HW = H * W

    # Free reshapes only — NCHW is contiguous as (C, H*W) and the gate as a
    # flat C_in row; no transposes, no extra HBM passes in the XLA wrapper.
    x_flat = x175.reshape(N, C_in, HW)
    g_row = x179.reshape(N, 1, C_in)
    w2d = weight.reshape(C_out, C_in)

    # Split C_out only when a second TensorCore exists to run the other slab
    # (v7x).  On single-TC v5e/v6e the grid is a sequential loop, so a second
    # j-step would only add ~0.35 us per-step overhead and halve the MXU
    # M-tile (160 rows instead of a full 320-row pass).
    j_blocks = 1
    if (_num_tensorcores() >= 2 and C_out % 2 == 0
            and (C_out // 2) % 8 == 0 and (C_out // 2) >= 128):
        j_blocks = 2
    cout_tile = C_out // j_blocks

    out_bytes = N * C_out * HW * x175.dtype.itemsize
    cost = pl.CostEstimate(
        flops=2 * N * C_out * C_in * HW,
        transcendentals=N * C_in,
        bytes_accessed=(x_flat.size * x_flat.dtype.itemsize
                        + g_row.size * g_row.dtype.itemsize
                        + w2d.size * w2d.dtype.itemsize
                        + out_bytes),
    )

    # TODO(synk): if this kernel is reused at much larger H*W, block the HW
    # axis too and set vmem_limit_bytes so 2 inputs x 2 buffers x tile plus
    # the weight slab stays under v7x's 32 MiB default scoped-VMEM limit
    # (64 MiB physical); at 14x14x320 the working set is ~1 MB so full-HW
    # blocks are the right choice.
    # TODO(synk): if the accuracy budget allows, cast x/weight to bf16 for the
    # matmul (sigmoid stays f32, f32 accumulation) to halve DMA bytes; kept in
    # f32 here to preserve the module's numerics.
    #
    # grid=(j_blocks, N): batch is the inner axis, so the weight slab (block
    # index invariant along n) stays VMEM-resident across batch elements when
    # N > 1 instead of being re-DMA'd every step.
    out_flat = pl.pallas_call(
        _se_gate_conv1x1_kernel,
        out_shape=jax.ShapeDtypeStruct((N, C_out, HW), x175.dtype),
        grid_spec=pltpu.PrefetchScalarGridSpec(
            num_scalar_prefetch=0,
            grid=(j_blocks, N),
            in_specs=[
                # gate logits row: lane-dense, one block per batch element
                pl.BlockSpec((None, 1, C_in), lambda j, n: (n, 0, 0)),
                # activations: one batch element per inner step
                pl.BlockSpec((None, C_in, HW), lambda j, n: (n, 0, 0)),
                # weight slab: invariant along n -> resident across the batch
                pl.BlockSpec((cout_tile, C_in), lambda j, n: (j, 0)),
            ],
            out_specs=pl.BlockSpec((None, cout_tile, HW), lambda j, n: (n, j, 0)),
        ),
        compiler_params=pltpu.CompilerParams(
            dimension_semantics=("parallel", "arbitrary"),
        ),
        cost_estimate=cost,
    )(g_row, x_flat, w2d)

    # Free reshape back to NCHW.
    return out_flat.reshape(N, C_out, H, W)


def _reference(x179, x175, weight):
    gate = jax.nn.sigmoid(x179)                               # (N, Cin, 1, 1)
    gated = gate * x175                                       # (N, Cin, H, W)
    w = weight.reshape(weight.shape[0], weight.shape[1])      # (Cout, Cin)
    # 1x1 conv == channel matmul
    return jnp.einsum("oc,nchw->nohw", w, gated)


if __name__ == "__main__":
    key = jax.random.PRNGKey(0)
    k1, k2, k3 = jax.random.split(key, 3)

    N, C, H, W = 1, 320, 14, 14
    C_out = 320

    x175 = jax.random.normal(k1, (N, C, H, W), dtype=jnp.float32)
    x179 = jax.random.normal(k2, (N, C, 1, 1), dtype=jnp.float32)
    # Deterministic conv weight init (kaiming-uniform-ish bound), (Cout, Cin, 1, 1)
    bound = 1.0 / (C ** 0.5)
    weight = jax.random.uniform(
        k3, (C_out, C, 1, 1), dtype=jnp.float32, minval=-bound, maxval=bound
    )

    out = sigmoid_mul_conv1x1(x179, x175, weight)
    out = jax.block_until_ready(out)

    ref = _reference(x179, x175, weight)
    assert out.shape == (N, C_out, H, W), out.shape
    assert jnp.allclose(out, ref, atol=1e-4, rtol=1e-4), "mismatch vs reference"

    print("KERNEL_OK")
</pallas_src>

<mosaic_0001>
module attributes {stable_mosaic.version = 11 : i64} {
  func.func @_se_gate_conv1x1_kernel(%arg0: i32, %arg1: i32, %arg2: memref<1x1x320xf32, #tpu.memory_space<vmem>>, %arg3: memref<1x320x196xf32, #tpu.memory_space<vmem>>, %arg4: memref<320x320xf32, #tpu.memory_space<vmem>>, %arg5: memref<1x320x196xf32, #tpu.memory_space<vmem>>) attributes {dimension_semantics = [#tpu.dimension_semantics<parallel>, #tpu.dimension_semantics<arbitrary>], iteration_bounds = array<i64: 1, 1>, scalar_prefetch = 0 : i64, scratch_operands = 0 : i64, tpu.core_type = #tpu.core_type<tc>, window_params = [{transform_indices = @transform_0, window_bounds = array<i64: 1, 1, 320>}, {transform_indices = @transform_1, window_bounds = array<i64: 1, 320, 196>}, {transform_indices = @transform_2, window_bounds = array<i64: 320, 320>}, {transform_indices = @transform_3, window_bounds = array<i64: 1, 320, 196>}]} {
    %c0 = arith.constant 0 : index
    %c0_0 = arith.constant 0 : index
    %c0_1 = arith.constant 0 : index
    %0 = vector.load %arg2[%c0, %c0_0, %c0_1] : memref<1x1x320xf32, #tpu.memory_space<vmem>>, vector<1x1x320xf32>
    %1 = vector.shape_cast %0 : vector<1x1x320xf32> to vector<1x320xf32>
    %2 = arith.negf %1 : vector<1x320xf32>
    %3 = math.exp %2 : vector<1x320xf32>
    %cst = arith.constant 1.000000e+00 : f32
    %4 = vector.broadcast %cst : f32 to vector<1x320xf32>
    %5 = arith.addf %4, %3 : vector<1x320xf32>
    %6 = arith.divf %4, %5 : vector<1x320xf32>
    %c0_2 = arith.constant 0 : index
    %c0_3 = arith.constant 0 : index
    %7 = vector.load %arg4[%c0_2, %c0_3] : memref<320x320xf32, #tpu.memory_space<vmem>>, vector<320x320xf32>
    %8 = vector.broadcast %6 : vector<1x320xf32> to vector<320x320xf32>
    %9 = arith.mulf %7, %8 : vector<320x320xf32>
    %c0_4 = arith.constant 0 : index
    %c0_5 = arith.constant 0 : index
    %c0_6 = arith.constant 0 : index
    %10 = vector.load %arg3[%c0_4, %c0_5, %c0_6] : memref<1x320x196xf32, #tpu.memory_space<vmem>>, vector<1x320x196xf32>
    %11 = vector.shape_cast %10 : vector<1x320x196xf32> to vector<320x196xf32>
    %cst_7 = arith.constant dense<0.000000e+00> : vector<320x196xf32>
    %12 = tpu.matmul %9, %11, %cst_7 {dimension_numbers = #tpu.dot_dimension_numbers<[1], [0], [0], [1], [0, 0, 1, 1], [], []>} : vector<320x320xf32>, vector<320x196xf32>, vector<320x196xf32> -> vector<320x196xf32>
    %c0_8 = arith.constant 0 : index
    %c0_9 = arith.constant 0 : index
    %c0_10 = arith.constant 0 : index
    %13 = vector.load %arg5[%c0_8, %c0_9, %c0_10] : memref<1x320x196xf32, #tpu.memory_space<vmem>>, vector<1x320x196xf32>
    %14 = vector.shape_cast %13 : vector<1x320x196xf32> to vector<320x196xf32>
    %15 = vector.shape_cast %12 : vector<320x196xf32> to vector<1x320x196xf32>
    tpu.vector_store %arg5[%c0_8, %c0_9, %c0_10], %15 {strides = array<i32>} : memref<1x320x196xf32, #tpu.memory_space<vmem>>, vector<1x320x196xf32>,
    return
  }
  func.func @transform_0(%arg0: i32, %arg1: i32) -> (i32, i32, i32) {
    %c0_i32 = arith.constant 0 : i32
    %c0_i32_0 = arith.constant 0 : i32
    %c0_i32_1 = arith.constant 0 : i32
    return %arg1, %c0_i32, %c0_i32_0 : i32, i32, i32
  }
  func.func @transform_1(%arg0: i32, %arg1: i32) -> (i32, i32, i32) {
    %c0_i32 = arith.constant 0 : i32
    %c0_i32_0 = arith.constant 0 : i32
    %c0_i32_1 = arith.constant 0 : i32
    return %arg1, %c0_i32, %c0_i32_0 : i32, i32, i32
  }
  func.func @transform_2(%arg0: i32, %arg1: i32) -> (i32, i32) {
    %c0_i32 = arith.constant 0 : i32
    %c0_i32_0 = arith.constant 0 : i32
    return %arg0, %c0_i32 : i32, i32
  }
  func.func @transform_3(%arg0: i32, %arg1: i32) -> (i32, i32, i32) {
    %c0_i32 = arith.constant 0 : i32
    %c0_i32_0 = arith.constant 0 : i32
    return %arg1, %arg0, %c0_i32 : i32, i32, i32
  }
}

</mosaic_0001>

<llo_original>
// kernel: tpu_custom_call.1
$region0: #{tpu_custom_call.1}
  #allocation0 [shape = 'u32[]', space=smem, size = 0x4, offset = 0x4, fixed_abs, tag = 'smem constant byte address 0x4 - core index']
  #allocation1 [shape = 'u32[144,128]{1,0:T(1,128)}', space=vmem, size = 0x12000, scoped, tag = 'internal scratch']
  %s0 = inlined_call_operand.vmem [shape: f32[1,1,320], index: 0, kind: input, shape index: {}]
  %s1 = inlined_call_operand.vmem [shape: f32[1,320,196], index: 1, kind: input, shape index: {}]
  %s2 = inlined_call_operand.vmem [shape: f32[320,320], index: 2, kind: input, shape index: {}]
  %s3 = inlined_call_operand.vmem [shape: f32[1,320,196], index: 3, kind: output, shape index: {}]
  %s4 = sld [smem:[#allocation0]]
  $region22: #{tpu_custom_call.1} parent=0
    _
  %s6 = ssub.s32 1, %s4
  %s7 = scalar_select 0, %s6, %s4
  // Predicated region
  $region2: #{tpu_custom_call.1} parent=0 // pred_check
    _
  $region3: #{tpu_custom_call.1} parent=0 // pred_check_branch
    %9 = sbr.rel (0) target = $region5
  $region4: #{tpu_custom_call.1} parent=0 // pred_region
    _
  $region5: #{tpu_custom_call.1} parent=0 // pred_fallthru
    _
  // Predicated region
  $region6: #{tpu_custom_call.1} parent=0 // pred_check
    _
  $region7: #{tpu_custom_call.1} parent=0 // pred_check_branch
    %11 = sbr.rel (0) target = $region9
  $region8: #{tpu_custom_call.1} parent=0 // pred_region
    _
  $region9: #{tpu_custom_call.1} parent=0 // pred_fallthru
    _
  // Predicated region
  $region10: #{tpu_custom_call.1} parent=0 // pred_check
    _
  $region11: #{tpu_custom_call.1} parent=0 // pred_check_branch
    %13 = sbr.rel (0) target = $region13
  $region12: #{tpu_custom_call.1} parent=0 // pred_region
    _
  $region13: #{tpu_custom_call.1} parent=0 // pred_fallthru
    _
  %v14 = vld [vmem:[%s0] sm:$0x7]
  %v15 = vxor.u32 %v14, 2147483648
  %v16 = vmul.f32 %v15, 1.442695
  %v17 = vpow.pop %v16
  %v18 = vadd.f32 %v17, 1.0
  %v19 = vrcp.pop %v18
  %v20 = vmul.f32 1.0, %v19
  %v21 = vld [vmem:[%s2] sm:$0xff]
  %v22 = vld [vmem:[%s2 + $0x8] sm:$0xff]
  %v23 = vld [vmem:[%s2 + $0x10] sm:$0xff]
  %v24 = vld [vmem:[%s2 + $0x18] sm:$0xff]
  %v25 = vld [vmem:[%s2 + $0x20] sm:$0xff]
  %v26 = vld [vmem:[%s2 + $0x28] sm:$0xff]
  %v27 = vld [vmem:[%s2 + $0x30] sm:$0xff]
  %v28 = vld [vmem:[%s2 + $0x38] sm:$0xff]
  %v29 = vld [vmem:[%s2 + $0x40] sm:$0xff]
  %v30 = vld [vmem:[%s2 + $0x48] sm:$0xff]
  %v31 = vld [vmem:[%s2 + $0x50] sm:$0xff]
  %v32 = vld [vmem:[%s2 + $0x58] sm:$0xff]
  %v33 = vld [vmem:[%s2 + $0x60] sm:$0xff]
  %v34 = vld [vmem:[%s2 + $0x68] sm:$0xff]
  %v35 = vld [vmem:[%s2 + $0x70] sm:$0xff]
  %v36 = vld [vmem:[%s2 + $0x78] sm:$0xff]
  %v37 = vld [vmem:[%s2 + $0x80] sm:$0xff]
  %v38 = vld [vmem:[%s2 + $0x88] sm:$0xff]
  %v39 = vld [vmem:[%s2 + $0x90] sm:$0xff]
  %v40 = vld [vmem:[%s2 + $0x98] sm:$0xff]
  %v41 = vld [vmem:[%s2 + $0xa0] sm:$0xff]
  %v42 = vld [vmem:[%s2 + $0xa8] sm:$0xff]
  %v43 = vld [vmem:[%s2 + $0xb0] sm:$0xff]
  %v44 = vld [vmem:[%s2 + $0xb8] sm:$0xff]
  %v45 = vld [vmem:[%s2 + $0xc0] sm:$0xff]
  %v46 = vld [vmem:[%s2 + $0xc8] sm:$0xff]
  %v47 = vld [vmem:[%s2 + $0xd0] sm:$0xff]
  %v48 = vld [vmem:[%s2 + $0xd8] sm:$0xff]
  %v49 = vld [vmem:[%s2 + $0xe0] sm:$0xff]
  %v50 = vld [vmem:[%s2 + $0xe8] sm:$0xff]
  %v51 = vld [vmem:[%s2 + $0xf0] sm:$0xff]
  %v52 = vld [vmem:[%s2 + $0xf8] sm:$0xff]
  %v53 = vld [vmem:[%s2 + $0x100] sm:$0xff]
  %v54 = vld [vmem:[%s2 + $0x108] sm:$0xff]
  %v55 = vld [vmem:[%s2 + $0x110] sm:$0xff]
  %v56 = vld [vmem:[%s2 + $0x118] sm:$0xff]
  %v57 = vld [vmem:[%s2 + $0x120] sm:$0xff]
  %v58 = vld [vmem:[%s2 + $0x128] sm:$0xff]
  %v59 = vld [vmem:[%s2 + $0x130] sm:$0xff]
  %v60 = vld [vmem:[%s2 + $0x138] sm:$0xff]
  %v61 = vld [vmem:[%s2 + $0x140] sm:$0xff]
  %v62 = vld [vmem:[%s2 + $0x148] sm:$0xff]
  %v63 = vld [vmem:[%s2 + $0x150] sm:$0xff]
  %v64 = vld [vmem:[%s2 + $0x158] sm:$0xff]
  %v65 = vld [vmem:[%s2 + $0x160] sm:$0xff]
  %v66 = vld [vmem:[%s2 + $0x168] sm:$0xff]
  %v67 = vld [vmem:[%s2 + $0x170] sm:$0xff]
  %v68 = vld [vmem:[%s2 + $0x178] sm:$0xff]
  %v69 = vld [vmem:[%s2 + $0x180] sm:$0xff]
  %v70 = vld [vmem:[%s2 + $0x188] sm:$0xff]
  %v71 = vld [vmem:[%s2 + $0x190] sm:$0xff]
  %v72 = vld [vmem:[%s2 + $0x198] sm:$0xff]
  %v73 = vld [vmem:[%s2 + $0x1a0] sm:$0xff]
  %v74 = vld [vmem:[%s2 + $0x1a8] sm:$0xff]
  %v75 = vld [vmem:[%s2 + $0x1b0] sm:$0xff]
  %v76 = vld [vmem:[%s2 + $0x1b8] sm:$0xff]
  %v77 = vld [vmem:[%s2 + $0x1c0] sm:$0xff]
  %v78 = vld [vmem:[%s2 + $0x1c8] sm:$0xff]
  %v79 = vld [vmem:[%s2 + $0x1d0] sm:$0xff]
  %v80 = vld [vmem:[%s2 + $0x1d8] sm:$0xff]
  %v81 = vld [vmem:[%s2 + $0x1e0] sm:$0xff]
  %v82 = vld [vmem:[%s2 + $0x1e8] sm:$0xff]
  %v83 = vld [vmem:[%s2 + $0x1f0] sm:$0xff]
  %v84 = vld [vmem:[%s2 + $0x1f8] sm:$0xff]
  %v85 = vld [vmem:[%s2 + $0x200] sm:$0xff]
  %v86 = vld [vmem:[%s2 + $0x208] sm:$0xff]
  %v87 = vld [vmem:[%s2 + $0x210] sm:$0xff]
  %v88 = vld [vmem:[%s2 + $0x218] sm:$0xff]
  %v89 = vld [vmem:[%s2 + $0x220] sm:$0xff]
  %v90 = vld [vmem:[%s2 + $0x228] sm:$0xff]
  %v91 = vld [vmem:[%s2 + $0x230] sm:$0xff]
  %v92 = vld [vmem:[%s2 + $0x238] sm:$0xff]
  %v93 = vld [vmem:[%s2 + $0x240] sm:$0xff]
  %v94 = vld [vmem:[%s2 + $0x248] sm:$0xff]
  %v95 = vld [vmem:[%s2 + $0x250] sm:$0xff]
  %v96 = vld [vmem:[%s2 + $0x258] sm:$0xff]
  %v97 = vld [vmem:[%s2 + $0x260] sm:$0xff]
  %v98 = vld [vmem:[%s2 + $0x268] sm:$0xff]
  %v99 = vld [vmem:[%s2 + $0x270] sm:$0xff]
  %v100 = vld [vmem:[%s2 + $0x278] sm:$0xff]
  %v101 = vld [vmem:[%s2 + $0x280] sm:$0xff]
  %v102 = vld [vmem:[%s2 + $0x288] sm:$0xff]
  %v103 = vld [vmem:[%s2 + $0x290] sm:$0xff]
  %v104 = vld [vmem:[%s2 + $0x298] sm:$0xff]
  %v105 = vld [vmem:[%s2 + $0x2a0] sm:$0xff]
  %v106 = vld [vmem:[%s2 + $0x2a8] sm:$0xff]
  %v107 = vld [vmem:[%s2 + $0x2b0] sm:$0xff]
  %v108 = vld [vmem:[%s2 + $0x2b8] sm:$0xff]
  %v109 = vld [vmem:[%s2 + $0x2c0] sm:$0xff]
  %v110 = vld [vmem:[%s2 + $0x2c8] sm:$0xff]
  %v111 = vld [vmem:[%s2 + $0x2d0] sm:$0xff]
  %v112 = vld [vmem:[%s2 + $0x2d8] sm:$0xff]
  %v113 = vld [vmem:[%s2 + $0x2e0] sm:$0xff]
  %v114 = vld [vmem:[%s2 + $0x2e8] sm:$0xff]
  %v115 = vld [vmem:[%s2 + $0x2f0] sm:$0xff]
  %v116 = vld [vmem:[%s2 + $0x2f8] sm:$0xff]
  %v117 = vld [vmem:[%s2 + $0x300] sm:$0xff]
  %v118 = vld [vmem:[%s2 + $0x308] sm:$0xff]
  %v119 = vld [vmem:[%s2 + $0x310] sm:$0xff]
  %v120 = vld [vmem:[%s2 + $0x318] sm:$0xff]
  %v121 = vld [vmem:[%s2 + $0x320] sm:$0xff]
  %v122 = vld [vmem:[%s2 + $0x328] sm:$0xff]
  %v123 = vld [vmem:[%s2 + $0x330] sm:$0xff]
  %v124 = vld [vmem:[%s2 + $0x338] sm:$0xff]
  %v125 = vld [vmem:[%s2 + $0x340] sm:$0xff]
  %v126 = vld [vmem:[%s2 + $0x348] sm:$0xff]
  %v127 = vld [vmem:[%s2 + $0x350] sm:$0xff]
  %v128 = vld [vmem:[%s2 + $0x358] sm:$0xff]
  %v129 = vld [vmem:[%s2 + $0x360] sm:$0xff]
  %v130 = vld [vmem:[%s2 + $0x368] sm:$0xff]
  %v131 = vld [vmem:[%s2 + $0x370] sm:$0xff]
  %v132 = vld [vmem:[%s2 + $0x378] sm:$0xff]
  %v133 = vld [vmem:[%s2 + $0x380] sm:$0xff]
  %v134 = vld [vmem:[%s2 + $0x388] sm:$0xff]
  %v135 = vld [vmem:[%s2 + $0x390] sm:$0xff]
  %v136 = vld [vmem:[%s2 + $0x398] sm:$0xff]
  %v137 = vld [vmem:[%s2 + $0x3a0] sm:$0xff]
  %v138 = vld [vmem:[%s2 + $0x3a8] sm:$0xff]
  %v139 = vld [vmem:[%s2 + $0x3b0] sm:$0xff]
  %v140 = vld [vmem:[%s2 + $0x3b8] sm:$0xff]
  %v142 = vlaneseq
  %v143 = vshrl.u32 %v142, 7
  %v144 = vsub.s32 0, %v143
  %v145 = vrot.slane %v20, %v144
  %v146 = vlaneseq
  %v147 = vshrl.u32 %v146, 7
  %v148 = vsub.s32 1, %v147
  %v149 = vrot.slane %v20, %v148
  %v150 = vlaneseq
  %v151 = vshrl.u32 %v150, 7
  %v152 = vsub.s32 2, %v151
  %v153 = vrot.slane %v20, %v152
  %v157 = vmul.f32 %v21, %v145
  %v158 = vmul.f32 %v22, %v149
  %v159 = vmul.f32 %v23, %v153
  %v160 = vmul.f32 %v24, %v145
  %v161 = vmul.f32 %v25, %v149
  %v162 = vmul.f32 %v26, %v153
  %v163 = vmul.f32 %v27, %v145
  %v164 = vmul.f32 %v28, %v149
  %v165 = vmul.f32 %v29, %v153
  %v166 = vmul.f32 %v30, %v145
  %v167 = vmul.f32 %v31, %v149
  %v168 = vmul.f32 %v32, %v153
  %v169 = vmul.f32 %v33, %v145
  %v170 = vmul.f32 %v34, %v149
  %v171 = vmul.f32 %v35, %v153
  %v172 = vmul.f32 %v36, %v145
  %v173 = vmul.f32 %v37, %v149
  %v174 = vmul.f32 %v38, %v153
  %v175 = vmul.f32 %v39, %v145
  %v176 = vmul.f32 %v40, %v149
  %v177 = vmul.f32 %v41, %v153
  %v178 = vmul.f32 %v42, %v145
  %v179 = vmul.f32 %v43, %v149
  %v180 = vmul.f32 %v44, %v153
  %v181 = vmul.f32 %v45, %v145
  %v182 = vmul.f32 %v46, %v149
  %v183 = vmul.f32 %v47, %v153
  %v184 = vmul.f32 %v48, %v145
  %v185 = vmul.f32 %v49, %v149
  %v186 = vmul.f32 %v50, %v153
  %v187 = vmul.f32 %v51, %v145
  %v188 = vmul.f32 %v52, %v149
  %v189 = vmul.f32 %v53, %v153
  %v190 = vmul.f32 %v54, %v145
  %v191 = vmul.f32 %v55, %v149
  %v192 = vmul.f32 %v56, %v153
  %v193 = vmul.f32 %v57, %v145
  %v194 = vmul.f32 %v58, %v149
  %v195 = vmul.f32 %v59, %v153
  %v196 = vmul.f32 %v60, %v145
  %v197 = vmul.f32 %v61, %v149
  %v198 = vmul.f32 %v62, %v153
  %v199 = vmul.f32 %v63, %v145
  %v200 = vmul.f32 %v64, %v149
  %v201 = vmul.f32 %v65, %v153
  %v202 = vmul.f32 %v66, %v145
  %v203 = vmul.f32 %v67, %v149
  %v204 = vmul.f32 %v68, %v153
  %v205 = vmul.f32 %v69, %v145
  %v206 = vmul.f32 %v70, %v149
  %v207 = vmul.f32 %v71, %v153
  %v208 = vmul.f32 %v72, %v145
  %v209 = vmul.f32 %v73, %v149
  %v210 = vmul.f32 %v74, %v153
  %v211 = vmul.f32 %v75, %v145
  %v212 = vmul.f32 %v76, %v149
  %v213 = vmul.f32 %v77, %v153
  %v214 = vmul.f32 %v78, %v145
  %v215 = vmul.f32 %v79, %v149
  %v216 = vmul.f32 %v80, %v153
  %v217 = vmul.f32 %v81, %v145
  %v218 = vmul.f32 %v82, %v149
  %v219 = vmul.f32 %v83, %v153
  %v220 = vmul.f32 %v84, %v145
  %v221 = vmul.f32 %v85, %v149
  %v222 = vmul.f32 %v86, %v153
  %v223 = vmul.f32 %v87, %v145
  %v224 = vmul.f32 %v88, %v149
  %v225 = vmul.f32 %v89, %v153
  %v226 = vmul.f32 %v90, %v145
  %v227 = vmul.f32 %v91, %v149
  %v228 = vmul.f32 %v92, %v153
  %v229 = vmul.f32 %v93, %v145
  %v230 = vmul.f32 %v94, %v149
  %v231 = vmul.f32 %v95, %v153
  %v232 = vmul.f32 %v96, %v145
  %v233 = vmul.f32 %v97, %v149
  %v234 = vmul.f32 %v98, %v153
  %v235 = vmul.f32 %v99, %v145
  %v236 = vmul.f32 %v100, %v149
  %v237 = vmul.f32 %v101, %v153
  %v238 = vmul.f32 %v102, %v145
  %v239 = vmul.f32 %v103, %v149
  %v240 = vmul.f32 %v104, %v153
  %v241 = vmul.f32 %v105, %v145
  %v242 = vmul.f32 %v106, %v149
  %v243 = vmul.f32 %v107, %v153
  %v244 = vmul.f32 %v108, %v145
  %v245 = vmul.f32 %v109, %v149
  %v246 = vmul.f32 %v110, %v153
  %v247 = vmul.f32 %v111, %v145
  %v248 = vmul.f32 %v112, %v149
  %v249 = vmul.f32 %v113, %v153
  %v250 = vmul.f32 %v114, %v145
  %v251 = vmul.f32 %v115, %v149
  %v252 = vmul.f32 %v116, %v153
  %v253 = vmul.f32 %v117, %v145
  %v254 = vmul.f32 %v118, %v149
  %v255 = vmul.f32 %v119, %v153
  %v256 = vmul.f32 %v120, %v145
  %v257 = vmul.f32 %v121, %v149
  %v258 = vmul.f32 %v122, %v153
  %v259 = vmul.f32 %v123, %v145
  %v260 = vmul.f32 %v124, %v149
  %v261 = vmul.f32 %v125, %v153
  %v262 = vmul.f32 %v126, %v145
  %v263 = vmul.f32 %v127, %v149
  %v264 = vmul.f32 %v128, %v153
  %v265 = vmul.f32 %v129, %v145
  %v266 = vmul.f32 %v130, %v149
  %v267 = vmul.f32 %v131, %v153
  %v268 = vmul.f32 %v132, %v145
  %v269 = vmul.f32 %v133, %v149
  %v270 = vmul.f32 %v134, %v153
  %v271 = vmul.f32 %v135, %v145
  %v272 = vmul.f32 %v136, %v149
  %v273 = vmul.f32 %v137, %v153
  %v274 = vmul.f32 %v138, %v145
  %v275 = vmul.f32 %v139, %v149
  %v276 = vmul.f32 %v140, %v153
  %v277 = vld [vmem:[%s1] sm:$0xff]
  %v278 = vld [vmem:[%s1 + $0x8] sm:$0xff]
  %v279 = vld [vmem:[%s1 + $0x10] sm:$0xff]
  %v280 = vld [vmem:[%s1 + $0x18] sm:$0xff]
  %v281 = vld [vmem:[%s1 + $0x20] sm:$0xff]
  %v282 = vld [vmem:[%s1 + $0x28] sm:$0xff]
  %v283 = vld [vmem:[%s1 + $0x30] sm:$0xff]
  %v284 = vld [vmem:[%s1 + $0x38] sm:$0xff]
  %v285 = vld [vmem:[%s1 + $0x40] sm:$0xff]
  %v286 = vld [vmem:[%s1 + $0x48] sm:$0xff]
  %v287 = vld [vmem:[%s1 + $0x50] sm:$0xff]
  %v288 = vld [vmem:[%s1 + $0x58] sm:$0xff]
  %v289 = vld [vmem:[%s1 + $0x60] sm:$0xff]
  %v290 = vld [vmem:[%s1 + $0x68] sm:$0xff]
  %v291 = vld [vmem:[%s1 + $0x70] sm:$0xff]
  %v292 = vld [vmem:[%s1 + $0x78] sm:$0xff]
  %v293 = vld [vmem:[%s1 + $0x80] sm:$0xff]
  %v294 = vld [vmem:[%s1 + $0x88] sm:$0xff]
  %v295 = vld [vmem:[%s1 + $0x90] sm:$0xff]
  %v296 = vld [vmem:[%s1 + $0x98] sm:$0xff]
  %v297 = vld [vmem:[%s1 + $0xa0] sm:$0xff]
  %v298 = vld [vmem:[%s1 + $0xa8] sm:$0xff]
  %v299 = vld [vmem:[%s1 + $0xb0] sm:$0xff]
  %v300 = vld [vmem:[%s1 + $0xb8] sm:$0xff]
  %v301 = vld [vmem:[%s1 + $0xc0] sm:$0xff]
  %v302 = vld [vmem:[%s1 + $0xc8] sm:$0xff]
  %v303 = vld [vmem:[%s1 + $0xd0] sm:$0xff]
  %v304 = vld [vmem:[%s1 + $0xd8] sm:$0xff]
  %v305 = vld [vmem:[%s1 + $0xe0] sm:$0xff]
  %v306 = vld [vmem:[%s1 + $0xe8] sm:$0xff]
  %v307 = vld [vmem:[%s1 + $0xf0] sm:$0xff]
  %v308 = vld [vmem:[%s1 + $0xf8] sm:$0xff]
  %v309 = vld [vmem:[%s1 + $0x100] sm:$0xff]
  %v310 = vld [vmem:[%s1 + $0x108] sm:$0xff]
  %v311 = vld [vmem:[%s1 + $0x110] sm:$0xff]
  %v312 = vld [vmem:[%s1 + $0x118] sm:$0xff]
  %v313 = vld [vmem:[%s1 + $0x120] sm:$0xff]
  %v314 = vld [vmem:[%s1 + $0x128] sm:$0xff]
  %v315 = vld [vmem:[%s1 + $0x130] sm:$0xff]
  %v316 = vld [vmem:[%s1 + $0x138] sm:$0xff]
  %v317 = vld [vmem:[%s1 + $0x140] sm:$0xff]
  %v318 = vld [vmem:[%s1 + $0x148] sm:$0xff]
  %v319 = vld [vmem:[%s1 + $0x150] sm:$0xff]
  %v320 = vld [vmem:[%s1 + $0x158] sm:$0xff]
  %v321 = vld [vmem:[%s1 + $0x160] sm:$0xff]
  %v322 = vld [vmem:[%s1 + $0x168] sm:$0xff]
  %v323 = vld [vmem:[%s1 + $0x170] sm:$0xff]
  %v324 = vld [vmem:[%s1 + $0x178] sm:$0xff]
  %v325 = vld [vmem:[%s1 + $0x180] sm:$0xff]
  %v326 = vld [vmem:[%s1 + $0x188] sm:$0xff]
  %v327 = vld [vmem:[%s1 + $0x190] sm:$0xff]
  %v328 = vld [vmem:[%s1 + $0x198] sm:$0xff]
  %v329 = vld [vmem:[%s1 + $0x1a0] sm:$0xff]
  %v330 = vld [vmem:[%s1 + $0x1a8] sm:$0xff]
  %v331 = vld [vmem:[%s1 + $0x1b0] sm:$0xff]
  %v332 = vld [vmem:[%s1 + $0x1b8] sm:$0xff]
  %v333 = vld [vmem:[%s1 + $0x1c0] sm:$0xff]
  %v334 = vld [vmem:[%s1 + $0x1c8] sm:$0xff]
  %v335 = vld [vmem:[%s1 + $0x1d0] sm:$0xff]
  %v336 = vld [vmem:[%s1 + $0x1d8] sm:$0xff]
  %v337 = vld [vmem:[%s1 + $0x1e0] sm:$0xff]
  %v338 = vld [vmem:[%s1 + $0x1e8] sm:$0xff]
  %v339 = vld [vmem:[%s1 + $0x1f0] sm:$0xff]
  %v340 = vld [vmem:[%s1 + $0x1f8] sm:$0xff]
  %v341 = vld [vmem:[%s1 + $0x200] sm:$0xff]
  %v342 = vld [vmem:[%s1 + $0x208] sm:$0xff]
  %v343 = vld [vmem:[%s1 + $0x210] sm:$0xff]
  %v344 = vld [vmem:[%s1 + $0x218] sm:$0xff]
  %v345 = vld [vmem:[%s1 + $0x220] sm:$0xff]
  %v346 = vld [vmem:[%s1 + $0x228] sm:$0xff]
  %v347 = vld [vmem:[%s1 + $0x230] sm:$0xff]
  %v348 = vld [vmem:[%s1 + $0x238] sm:$0xff]
  %v349 = vld [vmem:[%s1 + $0x240] sm:$0xff]
  %v350 = vld [vmem:[%s1 + $0x248] sm:$0xff]
  %v351 = vld [vmem:[%s1 + $0x250] sm:$0xff]
  %v352 = vld [vmem:[%s1 + $0x258] sm:$0xff]
  %v353 = vld [vmem:[%s1 + $0x260] sm:$0xff]
  %v354 = vld [vmem:[%s1 + $0x268] sm:$0xff]
  %v355 = vld [vmem:[%s1 + $0x270] sm:$0xff]
  %v356 = vld [vmem:[%s1 + $0x278] sm:$0xff]
  %vm357 = vcmask 523264
  %v359 = vsel %vm357, %v159, 0
  %v362 = vsel %vm357, %v162, 0
  %v365 = vsel %vm357, %v165, 0
  %v368 = vsel %vm357, %v168, 0
  %v371 = vsel %vm357, %v171, 0
  %v374 = vsel %vm357, %v174, 0
  %v377 = vsel %vm357, %v177, 0
  %v380 = vsel %vm357, %v180, 0
  %v383 = vsel %vm357, %v183, 0
  %v386 = vsel %vm357, %v186, 0
  %v389 = vsel %vm357, %v189, 0
  %v392 = vsel %vm357, %v192, 0
  %v395 = vsel %vm357, %v195, 0
  %v398 = vsel %vm357, %v198, 0
  %v401 = vsel %vm357, %v201, 0
  %v404 = vsel %vm357, %v204, 0
  %v407 = vsel %vm357, %v207, 0
  %v410 = vsel %vm357, %v210, 0
  %v413 = vsel %vm357, %v213, 0
  %v416 = vsel %vm357, %v216, 0
  %v419 = vsel %vm357, %v219, 0
  %v422 = vsel %vm357, %v222, 0
  %v425 = vsel %vm357, %v225, 0
  %v428 = vsel %vm357, %v228, 0
  %v431 = vsel %vm357, %v231, 0
  %v434 = vsel %vm357, %v234, 0
  %v437 = vsel %vm357, %v237, 0
  %v440 = vsel %vm357, %v240, 0
  %v443 = vsel %vm357, %v243, 0
  %v446 = vsel %vm357, %v246, 0
  %v449 = vsel %vm357, %v249, 0
  %v452 = vsel %vm357, %v252, 0
  %v455 = vsel %vm357, %v255, 0
  %v458 = vsel %vm357, %v258, 0
  %v461 = vsel %vm357, %v261, 0
  %v464 = vsel %vm357, %v264, 0
  %v467 = vsel %vm357, %v267, 0
  %v470 = vsel %vm357, %v270, 0
  %v473 = vsel %vm357, %v273, 0
  %v476 = vsel %vm357, %v276, 0
  %478 = vmatprep.subr.mxu0 %v308
  %479 = vmatpush1.msra.mxu0 %v307
  %480 = vmatprep.subr.mxu0 %v306
  %481 = vmatpush1.msra.mxu0 %v305
  %482 = vmatprep.subr.mxu0 %v304
  %483 = vmatpush1.msra.mxu0 %v303
  %484 = vmatprep.subr.mxu0 %v302
  %485 = vmatpush1.msra.mxu0 %v301
  %486 = vmatprep.subr.mxu0 %v300
  %487 = vmatpush1.msra.mxu0 %v299
  %488 = vmatprep.subr.mxu0 %v298
  %489 = vmatpush1.msra.mxu0 %v297
  %490 = vmatprep.subr.mxu0 %v296
  %491 = vmatpush1.msra.mxu0 %v295
  %492 = vmatprep.subr.mxu0 %v294
  %493 = vmatpush1.msra.mxu0 %v293
  %494 = vmatprep.subr.mxu0 %v292
  %495 = vmatpush1.msra.mxu0 %v291
  %496 = vmatprep.subr.mxu0 %v290
  %497 = vmatpush1.msra.mxu0 %v289
  %498 = vmatprep.subr.mxu0 %v288
  %499 = vmatpush1.msra.mxu0 %v287
  %500 = vmatprep.subr.mxu0 %v286
  %501 = vmatpush1.msra.mxu0 %v285
  %502 = vmatprep.subr.mxu0 %v284
  %503 = vmatpush1.msra.mxu0 %v283
  %504 = vmatprep.subr.mxu0 %v282
  %505 = vmatpush1.msra.mxu0 %v281
  %506 = vmatprep.subr.mxu0 %v280
  %507 = vmatpush1.msra.mxu0 %v279
  %508 = vmatprep.subr.mxu0 %v278
  %509 = vmatpush1.msra.mxu0 %v277
  %510 = vmatprep.subr.mxu0 %v340
  %511 = vmatpush2.msra.mxu0 %v339
  %512 = vmatprep.subr.mxu0 %v338
  %513 = vmatpush2.msra.mxu0 %v337
  %514 = vmatprep.subr.mxu0 %v336
  %515 = vmatpush2.msra.mxu0 %v335
  %516 = vmatprep.subr.mxu0 %v334
  %517 = vmatpush2.msra.mxu0 %v333
  %518 = vmatprep.subr.mxu0 %v332
  %519 = vmatpush2.msra.mxu0 %v331
  %520 = vmatprep.subr.mxu0 %v330
  %521 = vmatpush2.msra.mxu0 %v329
  %522 = vmatprep.subr.mxu0 %v328
  %523 = vmatpush2.msra.mxu0 %v327
  %524 = vmatprep.subr.mxu0 %v326
  %525 = vmatpush2.msra.mxu0 %v325
  %526 = vmatprep.subr.mxu0 %v324
  %527 = vmatpush2.msra.mxu0 %v323
  %528 = vmatprep.subr.mxu0 %v322
  %529 = vmatpush2.msra.mxu0 %v321
  %530 = vmatprep.subr.mxu0 %v320
  %531 = vmatpush2.msra.mxu0 %v319
  %532 = vmatprep.subr.mxu0 %v318
  %533 = vmatpush2.msra.mxu0 %v317
  %534 = vmatprep.subr.mxu0 %v316
  %535 = vmatpush2.msra.mxu0 %v315
  %536 = vmatprep.subr.mxu0 %v314
  %537 = vmatpush2.msra.mxu0 %v313
  %538 = vmatprep.subr.mxu0 %v312
  %539 = vmatpush2.msra.mxu0 %v311
  %540 = vmatprep.subr.mxu0 %v310
  %541 = vmatpush2.msra.mxu0 %v309
  %542 = vmatprep.mubr.f32.mxu0 %v158
  %543 = vmatmul.mubr.f32.gmra.mxu0 %v157
  %v544 = vpop.f32.mrf.mxu0
  %v545 = vadd.f32 0.0, %v544
  %v546 = vpop.f32.mrf.mxu0
  %v547 = vadd.f32 0.0, %v546
  %548 = vmatprep.mubr.f32.mxu0 %v161
  %549 = vmatmul.mubr.f32.gmra.mxu0 %v160
  %v550 = vpop.f32.mrf.mxu0
  %v551 = vadd.f32 0.0, %v550
  %v552 = vpop.f32.mrf.mxu0
  %v553 = vadd.f32 0.0, %v552
  %554 = vmatprep.mubr.f32.mxu0 %v164
  %555 = vmatmul.mubr.f32.gmra.mxu0 %v163
  %v556 = vpop.f32.mrf.mxu0
  %v557 = vadd.f32 0.0, %v556
  %v558 = vpop.f32.mrf.mxu0
  %v559 = vadd.f32 0.0, %v558
  %560 = vmatprep.mubr.f32.mxu0 %v167
  %561 = vmatmul.mubr.f32.gmra.mxu0 %v166
  %v562 = vpop.f32.mrf.mxu0
  %v563 = vadd.f32 0.0, %v562
  %v564 = vpop.f32.mrf.mxu0
  %v565 = vadd.f32 0.0, %v564
  %566 = vmatprep.mubr.f32.mxu0 %v170
  %567 = vmatmul.mubr.f32.gmra.mxu0 %v169
  %v568 = vpop.f32.mrf.mxu0
  %v569 = vadd.f32 0.0, %v568
  %v570 = vpop.f32.mrf.mxu0
  %v571 = vadd.f32 0.0, %v570
  %572 = vmatprep.mubr.f32.mxu0 %v173
  %573 = vmatmul.mubr.f32.gmra.mxu0 %v172
  %v574 = vpop.f32.mrf.mxu0
  %v575 = vadd.f32 0.0, %v574
  %v576 = vpop.f32.mrf.mxu0
  %v577 = vadd.f32 0.0, %v576
  %578 = vmatprep.mubr.f32.mxu0 %v176
  %579 = vmatmul.mubr.f32.gmra.mxu0 %v175
  %v580 = vpop.f32.mrf.mxu0
  %v581 = vadd.f32 0.0, %v580
  %v582 = vpop.f32.mrf.mxu0
  %v583 = vadd.f32 0.0, %v582
  %584 = vmatprep.mubr.f32.mxu0 %v179
  %585 = vmatmul.mubr.f32.gmra.mxu0 %v178
  %v586 = vpop.f32.mrf.mxu0
  %v587 = vadd.f32 0.0, %v586
  %v588 = vpop.f32.mrf.mxu0
  %v589 = vadd.f32 0.0, %v588
  %590 = vmatprep.mubr.f32.mxu0 %v182
  %591 = vmatmul.mubr.f32.gmra.mxu0 %v181
  %v592 = vpop.f32.mrf.mxu0
  %v593 = vadd.f32 0.0, %v592
  %v594 = vpop.f32.mrf.mxu0
  %v595 = vadd.f32 0.0, %v594
  %596 = vmatprep.mubr.f32.mxu0 %v185
  %597 = vmatmul.mubr.f32.gmra.mxu0 %v184
  %v598 = vpop.f32.mrf.mxu0
  %v599 = vadd.f32 0.0, %v598
  %v600 = vpop.f32.mrf.mxu0
  %v601 = vadd.f32 0.0, %v600
  %602 = vmatprep.mubr.f32.mxu0 %v188
  %603 = vmatmul.mubr.f32.gmra.mxu0 %v187
  %v604 = vpop.f32.mrf.mxu0
  %v605 = vadd.f32 0.0, %v604
  %v606 = vpop.f32.mrf.mxu0
  %v607 = vadd.f32 0.0, %v606
  %608 = vmatprep.mubr.f32.mxu0 %v191
  %609 = vmatmul.mubr.f32.gmra.mxu0 %v190
  %v610 = vpop.f32.mrf.mxu0
  %v611 = vadd.f32 0.0, %v610
  %v612 = vpop.f32.mrf.mxu0
  %v613 = vadd.f32 0.0, %v612
  %614 = vmatprep.mubr.f32.mxu0 %v194
  %615 = vmatmul.mubr.f32.gmra.mxu0 %v193
  %v616 = vpop.f32.mrf.mxu0
  %v617 = vadd.f32 0.0, %v616
  %v618 = vpop.f32.mrf.mxu0
  %v619 = vadd.f32 0.0, %v618
  %620 = vmatprep.mubr.f32.mxu0 %v197
  %621 = vmatmul.mubr.f32.gmra.mxu0 %v196
  %v622 = vpop.f32.mrf.mxu0
  %v623 = vadd.f32 0.0, %v622
  %v624 = vpop.f32.mrf.mxu0
  %v625 = vadd.f32 0.0, %v624
  %626 = vmatprep.mubr.f32.mxu0 %v200
  %627 = vmatmul.mubr.f32.gmra.mxu0 %v199
  %v628 = vpop.f32.mrf.mxu0
  %v629 = vadd.f32 0.0, %v628
  %v630 = vpop.f32.mrf.mxu0
  %v631 = vadd.f32 0.0, %v630
  %632 = vmatprep.mubr.f32.mxu0 %v203
  %633 = vmatmul.mubr.f32.gmra.mxu0 %v202
  %v634 = vpop.f32.mrf.mxu0
  %v635 = vadd.f32 0.0, %v634
  %v636 = vpop.f32.mrf.mxu0
  %v637 = vadd.f32 0.0, %v636
  %638 = vmatprep.mubr.f32.mxu0 %v206
  %639 = vmatmul.mubr.f32.gmra.mxu0 %v205
  %v640 = vpop.f32.mrf.mxu0
  %v641 = vadd.f32 0.0, %v640
  %v642 = vpop.f32.mrf.mxu0
  %v643 = vadd.f32 0.0, %v642
  %644 = vmatprep.mubr.f32.mxu0 %v209
  %645 = vmatmul.mubr.f32.gmra.mxu0 %v208
  %v646 = vpop.f32.mrf.mxu0
  %v647 = vadd.f32 0.0, %v646
  %v648 = vpop.f32.mrf.mxu0
  %v649 = vadd.f32 0.0, %v648
  %650 = vmatprep.mubr.f32.mxu0 %v212
  %651 = vmatmul.mubr.f32.gmra.mxu0 %v211
  %v652 = vpop.f32.mrf.mxu0
  %v653 = vadd.f32 0.0, %v652
  %v654 = vpop.f32.mrf.mxu0
  %v655 = vadd.f32 0.0, %v654
  %656 = vmatprep.mubr.f32.mxu0 %v215
  %657 = vmatmul.mubr.f32.gmra.mxu0 %v214
  %v658 = vpop.f32.mrf.mxu0
  %v659 = vadd.f32 0.0, %v658
  %v660 = vpop.f32.mrf.mxu0
  %v661 = vadd.f32 0.0, %v660
  %662 = vmatprep.mubr.f32.mxu0 %v218
  %663 = vmatmul.mubr.f32.gmra.mxu0 %v217
  %v664 = vpop.f32.mrf.mxu0
  %v665 = vadd.f32 0.0, %v664
  %v666 = vpop.f32.mrf.mxu0
  %v667 = vadd.f32 0.0, %v666
  %668 = vmatprep.mubr.f32.mxu0 %v221
  %669 = vmatmul.mubr.f32.gmra.mxu0 %v220
  %v670 = vpop.f32.mrf.mxu0
  %v671 = vadd.f32 0.0, %v670
  %v672 = vpop.f32.mrf.mxu0
  %v673 = vadd.f32 0.0, %v672
  %674 = vmatprep.mubr.f32.mxu0 %v224
  %675 = vmatmul.mubr.f32.gmra.mxu0 %v223
  %v676 = vpop.f32.mrf.mxu0
  %v677 = vadd.f32 0.0, %v676
  %v678 = vpop.f32.mrf.mxu0
  %v679 = vadd.f32 0.0, %v678
  %680 = vmatprep.mubr.f32.mxu0 %v227
  %681 = vmatmul.mubr.f32.gmra.mxu0 %v226
  %v682 = vpop.f32.mrf.mxu0
  %v683 = vadd.f32 0.0, %v682
  %v684 = vpop.f32.mrf.mxu0
  %v685 = vadd.f32 0.0, %v684
  %686 = vmatprep.mubr.f32.mxu0 %v230
  %687 = vmatmul.mubr.f32.gmra.mxu0 %v229
  %v688 = vpop.f32.mrf.mxu0
  %v689 = vadd.f32 0.0, %v688
  %v690 = vpop.f32.mrf.mxu0
  %v691 = vadd.f32 0.0, %v690
  %692 = vmatprep.mubr.f32.mxu0 %v233
  %693 = vmatmul.mubr.f32.gmra.mxu0 %v232
  %v694 = vpop.f32.mrf.mxu0
  %v695 = vadd.f32 0.0, %v694
  %v696 = vpop.f32.mrf.mxu0
  %v697 = vadd.f32 0.0, %v696
  %698 = vmatprep.mubr.f32.mxu0 %v236
  %699 = vmatmul.mubr.f32.gmra.mxu0 %v235
  %v700 = vpop.f32.mrf.mxu0
  %v701 = vadd.f32 0.0, %v700
  %v702 = vpop.f32.mrf.mxu0
  %v703 = vadd.f32 0.0, %v702
  %704 = vmatprep.mubr.f32.mxu0 %v239
  %705 = vmatmul.mubr.f32.gmra.mxu0 %v238
  %v706 = vpop.f32.mrf.mxu0
  %v707 = vadd.f32 0.0, %v706
  %v708 = vpop.f32.mrf.mxu0
  %v709 = vadd.f32 0.0, %v708
  %710 = vmatprep.mubr.f32.mxu0 %v242
  %711 = vmatmul.mubr.f32.gmra.mxu0 %v241
  %v712 = vpop.f32.mrf.mxu0
  %v713 = vadd.f32 0.0, %v712
  %v714 = vpop.f32.mrf.mxu0
  %v715 = vadd.f32 0.0, %v714
  %716 = vmatprep.mubr.f32.mxu0 %v245
  %717 = vmatmul.mubr.f32.gmra.mxu0 %v244
  %v718 = vpop.f32.mrf.mxu0
  %v719 = vadd.f32 0.0, %v718
  %v720 = vpop.f32.mrf.mxu0
  %v721 = vadd.f32 0.0, %v720
  %722 = vmatprep.mubr.f32.mxu0 %v248
  %723 = vmatmul.mubr.f32.gmra.mxu0 %v247
  %v724 = vpop.f32.mrf.mxu0
  %v725 = vadd.f32 0.0, %v724
  %v726 = vpop.f32.mrf.mxu0
  %v727 = vadd.f32 0.0, %v726
  %728 = vmatprep.mubr.f32.mxu0 %v251
  %729 = vmatmul.mubr.f32.gmra.mxu0 %v250
  %v730 = vpop.f32.mrf.mxu0
  %v731 = vadd.f32 0.0, %v730
  %v732 = vpop.f32.mrf.mxu0
  %v733 = vadd.f32 0.0, %v732
  %734 = vmatprep.mubr.f32.mxu0 %v254
  %735 = vmatmul.mubr.f32.gmra.mxu0 %v253
  %v736 = vpop.f32.mrf.mxu0
  %v737 = vadd.f32 0.0, %v736
  %v738 = vpop.f32.mrf.mxu0
  %v739 = vadd.f32 0.0, %v738
  %740 = vmatprep.mubr.f32.mxu0 %v257
  %741 = vmatmul.mubr.f32.gmra.mxu0 %v256
  %v742 = vpop.f32.mrf.mxu0
  %v743 = vadd.f32 0.0, %v742
  %v744 = vpop.f32.mrf.mxu0
  %v745 = vadd.f32 0.0, %v744
  %746 = vmatprep.mubr.f32.mxu0 %v260
  %747 = vmatmul.mubr.f32.gmra.mxu0 %v259
  %v748 = vpop.f32.mrf.mxu0
  %v749 = vadd.f32 0.0, %v748
  %v750 = vpop.f32.mrf.mxu0
  %v751 = vadd.f32 0.0, %v750
  %752 = vmatprep.mubr.f32.mxu0 %v263
  %753 = vmatmul.mubr.f32.gmra.mxu0 %v262
  %v754 = vpop.f32.mrf.mxu0
  %v755 = vadd.f32 0.0, %v754
  %v756 = vpop.f32.mrf.mxu0
  %v757 = vadd.f32 0.0, %v756
  %758 = vmatprep.mubr.f32.mxu0 %v266
  %759 = vmatmul.mubr.f32.gmra.mxu0 %v265
  %v760 = vpop.f32.mrf.mxu0
  %v761 = vadd.f32 0.0, %v760
  %v762 = vpop.f32.mrf.mxu0
  %v763 = vadd.f32 0.0, %v762
  %764 = vmatprep.mubr.f32.mxu0 %v269
  %765 = vmatmul.mubr.f32.gmra.mxu0 %v268
  %v766 = vpop.f32.mrf.mxu0
  %v767 = vadd.f32 0.0, %v766
  %v768 = vpop.f32.mrf.mxu0
  %v769 = vadd.f32 0.0, %v768
  %770 = vmatprep.mubr.f32.mxu0 %v272
  %771 = vmatmul.mubr.f32.gmra.mxu0 %v271
  %v772 = vpop.f32.mrf.mxu0
  %v773 = vadd.f32 0.0, %v772
  %v774 = vpop.f32.mrf.mxu0
  %v775 = vadd.f32 0.0, %v774
  %776 = vmatprep.mubr.f32.mxu0 %v275
  %777 = vmatmul.mubr.f32.gmra.mxu0 %v274
  %v778 = vpop.f32.mrf.mxu0
  %v779 = vadd.f32 0.0, %v778
  %v780 = vpop.f32.mrf.mxu0
  %v781 = vadd.f32 0.0, %v780
  %782 = vdwg.mxu0
  %783 = vmatprep.subr.mxu0 0.0
  %784 = vmatpush1.msra.mxu0 0.0
  %785 = vmatprep.subr.mxu0 0.0
  %786 = vmatpush1.msra.mxu0 0.0
  %787 = vmatprep.subr.mxu0 0.0
  %788 = vmatpush1.msra.mxu0 0.0
  %789 = vmatprep.subr.mxu0 0.0
  %790 = vmatpush1.msra.mxu0 0.0
  %791 = vmatprep.subr.mxu0 0.0
  %792 = vmatpush1.msra.mxu0 0.0
  %793 = vmatprep.subr.mxu0 0.0
  %794 = vmatpush1.msra.mxu0 0.0
  %795 = vmatprep.subr.mxu0 0.0
  %796 = vmatpush1.msra.mxu0 0.0
  %797 = vmatprep.subr.mxu0 0.0
  %798 = vmatpush1.msra.mxu0 0.0
  %799 = vmatprep.subr.mxu0 %v356
  %800 = vmatpush1.msra.mxu0 %v355
  %801 = vmatprep.subr.mxu0 %v354
  %802 = vmatpush1.msra.mxu0 %v353
  %803 = vmatprep.subr.mxu0 %v352
  %804 = vmatpush1.msra.mxu0 %v351
  %805 = vmatprep.subr.mxu0 %v350
  %806 = vmatpush1.msra.mxu0 %v349
  %807 = vmatprep.subr.mxu0 %v348
  %808 = vmatpush1.msra.mxu0 %v347
  %809 = vmatprep.subr.mxu0 %v346
  %810 = vmatpush1.msra.mxu0 %v345
  %811 = vmatprep.subr.mxu0 %v344
  %812 = vmatpush1.msra.mxu0 %v343
  %813 = vmatprep.subr.mxu0 %v342
  %814 = vmatpush1.msra.mxu0 %v341
  %815 = vmatprep.subr.mxu0 0.0
  %816 = vmatpush2.msra.mxu0 0.0
  %817 = vmatprep.subr.mxu0 0.0
  %818 = vmatpush2.msra.mxu0 0.0
  %819 = vmatprep.subr.mxu0 0.0
  %820 = vmatpush2.msra.mxu0 0.0
  %821 = vmatprep.subr.mxu0 0.0
  %822 = vmatpush2.msra.mxu0 0.0
  %823 = vmatprep.subr.mxu0 0.0
  %824 = vmatpush2.msra.mxu0 0.0
  %825 = vmatprep.subr.mxu0 0.0
  %826 = vmatpush2.msra.mxu0 0.0
  %827 = vmatprep.subr.mxu0 0.0
  %828 = vmatpush2.msra.mxu0 0.0
  %829 = vmatprep.subr.mxu0 0.0
  %830 = vmatpush2.msra.mxu0 0.0
  %831 = vmatprep.subr.mxu0 0.0
  %832 = vmatpush2.msra.mxu0 0.0
  %833 = vmatprep.subr.mxu0 0.0
  %834 = vmatpush2.msra.mxu0 0.0
  %835 = vmatprep.subr.mxu0 0.0
  %836 = vmatpush2.msra.mxu0 0.0
  %837 = vmatprep.subr.mxu0 0.0
  %838 = vmatpush2.msra.mxu0 0.0
  %839 = vmatprep.subr.mxu0 0.0
  %840 = vmatpush2.msra.mxu0 0.0
  %841 = vmatprep.subr.mxu0 0.0
  %842 = vmatpush2.msra.mxu0 0.0
  %843 = vmatprep.subr.mxu0 0.0
  %844 = vmatpush2.msra.mxu0 0.0
  %845 = vmatprep.subr.mxu0 0.0
  %846 = vmatpush2.msra.mxu0 0.0
  %847 = vmatprep.mubr.f32.mxu0 0.0
  %848 = vmatmul.mubr.f32.gmra.mxu0 %v359
  %v849 = vpop.f32.mrf.mxu0
  %v850 = vadd.f32 %v545, %v849
  %v851 = vpop.f32.mrf.mxu0
  %v852 = vadd.f32 %v547, %v851
  %853 = vmatprep.mubr.f32.mxu0 0.0
  %854 = vmatmul.mubr.f32.gmra.mxu0 %v362
  %v855 = vpop.f32.mrf.mxu0
  %v856 = vadd.f32 %v551, %v855
  %v857 = vpop.f32.mrf.mxu0
  %v858 = vadd.f32 %v553, %v857
  %859 = vmatprep.mubr.f32.mxu0 0.0
  %860 = vmatmul.mubr.f32.gmra.mxu0 %v365
  %v861 = vpop.f32.mrf.mxu0
  %v862 = vadd.f32 %v557, %v861
  %v863 = vpop.f32.mrf.mxu0
  %v864 = vadd.f32 %v559, %v863
  %865 = vmatprep.mubr.f32.mxu0 0.0
  %866 = vmatmul.mubr.f32.gmra.mxu0 %v368
  %v867 = vpop.f32.mrf.mxu0
  %v868 = vadd.f32 %v563, %v867
  %v869 = vpop.f32.mrf.mxu0
  %v870 = vadd.f32 %v565, %v869
  %871 = vmatprep.mubr.f32.mxu0 0.0
  %872 = vmatmul.mubr.f32.gmra.mxu0 %v371
  %v873 = vpop.f32.mrf.mxu0
  %v874 = vadd.f32 %v569, %v873
  %v875 = vpop.f32.mrf.mxu0
  %v876 = vadd.f32 %v571, %v875
  %877 = vmatprep.mubr.f32.mxu0 0.0
  %878 = vmatmul.mubr.f32.gmra.mxu0 %v374
  %v879 = vpop.f32.mrf.mxu0
  %v880 = vadd.f32 %v575, %v879
  %v881 = vpop.f32.mrf.mxu0
  %v882 = vadd.f32 %v577, %v881
  %883 = vmatprep.mubr.f32.mxu0 0.0
  %884 = vmatmul.mubr.f32.gmra.mxu0 %v377
  %v885 = vpop.f32.mrf.mxu0
  %v886 = vadd.f32 %v581, %v885
  %v887 = vpop.f32.mrf.mxu0
  %v888 = vadd.f32 %v583, %v887
  %889 = vmatprep.mubr.f32.mxu0 0.0
  %890 = vmatmul.mubr.f32.gmra.mxu0 %v380
  %v891 = vpop.f32.mrf.mxu0
  %v892 = vadd.f32 %v587, %v891
  %v893 = vpop.f32.mrf.mxu0
  %v894 = vadd.f32 %v589, %v893
  %895 = vmatprep.mubr.f32.mxu0 0.0
  %896 = vmatmul.mubr.f32.gmra.mxu0 %v383
  %v897 = vpop.f32.mrf.mxu0
  %v898 = vadd.f32 %v593, %v897
  %v899 = vpop.f32.mrf.mxu0
  %v900 = vadd.f32 %v595, %v899
  %901 = vmatprep.mubr.f32.mxu0 0.0
  %902 = vmatmul.mubr.f32.gmra.mxu0 %v386
  %v903 = vpop.f32.mrf.mxu0
  %v904 = vadd.f32 %v599, %v903
  %v905 = vpop.f32.mrf.mxu0
  %v906 = vadd.f32 %v601, %v905
  %907 = vmatprep.mubr.f32.mxu0 0.0
  %908 = vmatmul.mubr.f32.gmra.mxu0 %v389
  %v909 = vpop.f32.mrf.mxu0
  %v910 = vadd.f32 %v605, %v909
  %v911 = vpop.f32.mrf.mxu0
  %v912 = vadd.f32 %v607, %v911
  %913 = vmatprep.mubr.f32.mxu0 0.0
  %914 = vmatmul.mubr.f32.gmra.mxu0 %v392
  %v915 = vpop.f32.mrf.mxu0
  %v916 = vadd.f32 %v611, %v915
  %v917 = vpop.f32.mrf.mxu0
  %v918 = vadd.f32 %v613, %v917
  %919 = vmatprep.mubr.f32.mxu0 0.0
  %920 = vmatmul.mubr.f32.gmra.mxu0 %v395
  %v921 = vpop.f32.mrf.mxu0
  %v922 = vadd.f32 %v617, %v921
  %v923 = vpop.f32.mrf.mxu0
  %v924 = vadd.f32 %v619, %v923
  %925 = vmatprep.mubr.f32.mxu0 0.0
  %926 = vmatmul.mubr.f32.gmra.mxu0 %v398
  %v927 = vpop.f32.mrf.mxu0
  %v928 = vadd.f32 %v623, %v927
  %v929 = vpop.f32.mrf.mxu0
  %v930 = vadd.f32 %v625, %v929
  %931 = vmatprep.mubr.f32.mxu0 0.0
  %932 = vmatmul.mubr.f32.gmra.mxu0 %v401
  %v933 = vpop.f32.mrf.mxu0
  %v934 = vadd.f32 %v629, %v933
  %v935 = vpop.f32.mrf.mxu0
  %v936 = vadd.f32 %v631, %v935
  %937 = vmatprep.mubr.f32.mxu0 0.0
  %938 = vmatmul.mubr.f32.gmra.mxu0 %v404
  %v939 = vpop.f32.mrf.mxu0
  %v940 = vadd.f32 %v635, %v939
  %v941 = vpop.f32.mrf.mxu0
  %v942 = vadd.f32 %v637, %v941
  %943 = vmatprep.mubr.f32.mxu0 0.0
  %944 = vmatmul.mubr.f32.gmra.mxu0 %v407
  %v945 = vpop.f32.mrf.mxu0
  %v946 = vadd.f32 %v641, %v945
  %v947 = vpop.f32.mrf.mxu0
  %v948 = vadd.f32 %v643, %v947
  %949 = vmatprep.mubr.f32.mxu0 0.0
  %950 = vmatmul.mubr.f32.gmra.mxu0 %v410
  %v951 = vpop.f32.mrf.mxu0
  %v952 = vadd.f32 %v647, %v951
  %v953 = vpop.f32.mrf.mxu0
  %v954 = vadd.f32 %v649, %v953
  %955 = vmatprep.mubr.f32.mxu0 0.0
  %956 = vmatmul.mubr.f32.gmra.mxu0 %v413
  %v957 = vpop.f32.mrf.mxu0
  %v958 = vadd.f32 %v653, %v957
  %v959 = vpop.f32.mrf.mxu0
  %v960 = vadd.f32 %v655, %v959
  %961 = vmatprep.mubr.f32.mxu0 0.0
  %962 = vmatmul.mubr.f32.gmra.mxu0 %v416
  %v963 = vpop.f32.mrf.mxu0
  %v964 = vadd.f32 %v659, %v963
  %v965 = vpop.f32.mrf.mxu0
  %v966 = vadd.f32 %v661, %v965
  %967 = vmatprep.mubr.f32.mxu0 0.0
  %968 = vmatmul.mubr.f32.gmra.mxu0 %v419
  %v969 = vpop.f32.mrf.mxu0
  %v970 = vadd.f32 %v665, %v969
  %v971 = vpop.f32.mrf.mxu0
  %v972 = vadd.f32 %v667, %v971
  %973 = vmatprep.mubr.f32.mxu0 0.0
  %974 = vmatmul.mubr.f32.gmra.mxu0 %v422
  %v975 = vpop.f32.mrf.mxu0
  %v976 = vadd.f32 %v671, %v975
  %v977 = vpop.f32.mrf.mxu0
  %v978 = vadd.f32 %v673, %v977
  %979 = vmatprep.mubr.f32.mxu0 0.0
  %980 = vmatmul.mubr.f32.gmra.mxu0 %v425
  %v981 = vpop.f32.mrf.mxu0
  %v982 = vadd.f32 %v677, %v981
  %v983 = vpop.f32.mrf.mxu0
  %v984 = vadd.f32 %v679, %v983
  %985 = vmatprep.mubr.f32.mxu0 0.0
  %986 = vmatmul.mubr.f32.gmra.mxu0 %v428
  %v987 = vpop.f32.mrf.mxu0
  %v988 = vadd.f32 %v683, %v987
  %v989 = vpop.f32.mrf.mxu0
  %v990 = vadd.f32 %v685, %v989
  %991 = vmatprep.mubr.f32.mxu0 0.0
  %992 = vmatmul.mubr.f32.gmra.mxu0 %v431
  %v993 = vpop.f32.mrf.mxu0
  %v994 = vadd.f32 %v689, %v993
  %v995 = vpop.f32.mrf.mxu0
  %v996 = vadd.f32 %v691, %v995
  %997 = vmatprep.mubr.f32.mxu0 0.0
  %998 = vmatmul.mubr.f32.gmra.mxu0 %v434
  %v999 = vpop.f32.mrf.mxu0
  %v1000 = vadd.f32 %v695, %v999
  %v1001 = vpop.f32.mrf.mxu0
  %v1002 = vadd.f32 %v697, %v1001
  %1003 = vmatprep.mubr.f32.mxu0 0.0
  %1004 = vmatmul.mubr.f32.gmra.mxu0 %v437
  %v1005 = vpop.f32.mrf.mxu0
  %v1006 = vadd.f32 %v701, %v1005
  %v1007 = vpop.f32.mrf.mxu0
  %v1008 = vadd.f32 %v703, %v1007
  %1009 = vmatprep.mubr.f32.mxu0 0.0
  %1010 = vmatmul.mubr.f32.gmra.mxu0 %v440
  %v1011 = vpop.f32.mrf.mxu0
  %v1012 = vadd.f32 %v707, %v1011
  %v1013 = vpop.f32.mrf.mxu0
  %v1014 = vadd.f32 %v709, %v1013
  %1015 = vmatprep.mubr.f32.mxu0 0.0
  %1016 = vmatmul.mubr.f32.gmra.mxu0 %v443
  %v1017 = vpop.f32.mrf.mxu0
  %v1018 = vadd.f32 %v713, %v1017
  %v1019 = vpop.f32.mrf.mxu0
  %v1020 = vadd.f32 %v715, %v1019
  %1021 = vmatprep.mubr.f32.mxu0 0.0
  %1022 = vmatmul.mubr.f32.gmra.mxu0 %v446
  %v1023 = vpop.f32.mrf.mxu0
  %v1024 = vadd.f32 %v719, %v1023
  %v1025 = vpop.f32.mrf.mxu0
  %v1026 = vadd.f32 %v721, %v1025
  %1027 = vmatprep.mubr.f32.mxu0 0.0
  %1028 = vmatmul.mubr.f32.gmra.mxu0 %v449
  %v1029 = vpop.f32.mrf.mxu0
  %v1030 = vadd.f32 %v725, %v1029
  %v1031 = vpop.f32.mrf.mxu0
  %v1032 = vadd.f32 %v727, %v1031
  %1033 = vmatprep.mubr.f32.mxu0 0.0
  %1034 = vmatmul.mubr.f32.gmra.mxu0 %v452
  %v1035 = vpop.f32.mrf.mxu0
  %v1036 = vadd.f32 %v731, %v1035
  %v1037 = vpop.f32.mrf.mxu0
  %v1038 = vadd.f32 %v733, %v1037
  %1039 = vmatprep.mubr.f32.mxu0 0.0
  %1040 = vmatmul.mubr.f32.gmra.mxu0 %v455
  %v1041 = vpop.f32.mrf.mxu0
  %v1042 = vadd.f32 %v737, %v1041
  %v1043 = vpop.f32.mrf.mxu0
  %v1044 = vadd.f32 %v739, %v1043
  %1045 = vmatprep.mubr.f32.mxu0 0.0
  %1046 = vmatmul.mubr.f32.gmra.mxu0 %v458
  %v1047 = vpop.f32.mrf.mxu0
  %v1048 = vadd.f32 %v743, %v1047
  %v1049 = vpop.f32.mrf.mxu0
  %v1050 = vadd.f32 %v745, %v1049
  %1051 = vmatprep.mubr.f32.mxu0 0.0
  %1052 = vmatmul.mubr.f32.gmra.mxu0 %v461
  %v1053 = vpop.f32.mrf.mxu0
  %v1054 = vadd.f32 %v749, %v1053
  %v1055 = vpop.f32.mrf.mxu0
  %v1056 = vadd.f32 %v751, %v1055
  %1057 = vmatprep.mubr.f32.mxu0 0.0
  %1058 = vmatmul.mubr.f32.gmra.mxu0 %v464
  %v1059 = vpop.f32.mrf.mxu0
  %v1060 = vadd.f32 %v755, %v1059
  %v1061 = vpop.f32.mrf.mxu0
  %v1062 = vadd.f32 %v757, %v1061
  %1063 = vmatprep.mubr.f32.mxu0 0.0
  %1064 = vmatmul.mubr.f32.gmra.mxu0 %v467
  %v1065 = vpop.f32.mrf.mxu0
  %v1066 = vadd.f32 %v761, %v1065
  %v1067 = vpop.f32.mrf.mxu0
  %v1068 = vadd.f32 %v763, %v1067
  %1069 = vmatprep.mubr.f32.mxu0 0.0
  %1070 = vmatmul.mubr.f32.gmra.mxu0 %v470
  %v1071 = vpop.f32.mrf.mxu0
  %v1072 = vadd.f32 %v767, %v1071
  %v1073 = vpop.f32.mrf.mxu0
  %v1074 = vadd.f32 %v769, %v1073
  %1075 = vmatprep.mubr.f32.mxu0 0.0
  %1076 = vmatmul.mubr.f32.gmra.mxu0 %v473
  %v1077 = vpop.f32.mrf.mxu0
  %v1078 = vadd.f32 %v773, %v1077
  %v1079 = vpop.f32.mrf.mxu0
  %v1080 = vadd.f32 %v775, %v1079
  %1081 = vmatprep.mubr.f32.mxu0 0.0
  %1082 = vmatmul.mubr.f32.gmra.mxu0 %v476
  %v1083 = vpop.f32.mrf.mxu0
  %v1084 = vadd.f32 %v779, %v1083
  %v1085 = vpop.f32.mrf.mxu0
  %v1086 = vadd.f32 %v781, %v1085
  %1087 = vdwg.mxu0
  %1088 = vst [vmem:[%s3] sm:$0xff] %v850
  %vm1089 = vcmask 556032
  %1090 = vst.msk [vmem:[%s3 + $0x8] sm:$0xff] %vm1089, %v852
  %1091 = vst [vmem:[%s3 + $0x10] sm:$0xff] %v856
  %1092 = vst.msk [vmem:[%s3 + $0x18] sm:$0xff] %vm1089, %v858
  %1093 = vst [vmem:[%s3 + $0x20] sm:$0xff] %v862
  %1094 = vst.msk [vmem:[%s3 + $0x28] sm:$0xff] %vm1089, %v864
  %1095 = vst [vmem:[%s3 + $0x30] sm:$0xff] %v868
  %1096 = vst.msk [vmem:[%s3 + $0x38] sm:$0xff] %vm1089, %v870
  %1097 = vst [vmem:[%s3 + $0x40] sm:$0xff] %v874
  %1098 = vst.msk [vmem:[%s3 + $0x48] sm:$0xff] %vm1089, %v876
  %1099 = vst [vmem:[%s3 + $0x50] sm:$0xff] %v880
  %1100 = vst.msk [vmem:[%s3 + $0x58] sm:$0xff] %vm1089, %v882
  %1101 = vst [vmem:[%s3 + $0x60] sm:$0xff] %v886
  %1102 = vst.msk [vmem:[%s3 + $0x68] sm:$0xff] %vm1089, %v888
  %1103 = vst [vmem:[%s3 + $0x70] sm:$0xff] %v892
  %1104 = vst.msk [vmem:[%s3 + $0x78] sm:$0xff] %vm1089, %v894
  %1105 = vst [vmem:[%s3 + $0x80] sm:$0xff] %v898
  %1106 = vst.msk [vmem:[%s3 + $0x88] sm:$0xff] %vm1089, %v900
  %1107 = vst [vmem:[%s3 + $0x90] sm:$0xff] %v904
  %1108 = vst.msk [vmem:[%s3 + $0x98] sm:$0xff] %vm1089, %v906
  %1109 = vst [vmem:[%s3 + $0xa0] sm:$0xff] %v910
  %1110 = vst.msk [vmem:[%s3 + $0xa8] sm:$0xff] %vm1089, %v912
  %1111 = vst [vmem:[%s3 + $0xb0] sm:$0xff] %v916
  %1112 = vst.msk [vmem:[%s3 + $0xb8] sm:$0xff] %vm1089, %v918
  %1113 = vst [vmem:[%s3 + $0xc0] sm:$0xff] %v922
  %1114 = vst.msk [vmem:[%s3 + $0xc8] sm:$0xff] %vm1089, %v924
  %1115 = vst [vmem:[%s3 + $0xd0] sm:$0xff] %v928
  %1116 = vst.msk [vmem:[%s3 + $0xd8] sm:$0xff] %vm1089, %v930
  %1117 = vst [vmem:[%s3 + $0xe0] sm:$0xff] %v934
  %1118 = vst.msk [vmem:[%s3 + $0xe8] sm:$0xff] %vm1089, %v936
  %1119 = vst [vmem:[%s3 + $0xf0] sm:$0xff] %v940
  %1120 = vst.msk [vmem:[%s3 + $0xf8] sm:$0xff] %vm1089, %v942
  %1121 = vst [vmem:[%s3 + $0x100] sm:$0xff] %v946
  %1122 = vst.msk [vmem:[%s3 + $0x108] sm:$0xff] %vm1089, %v948
  %1123 = vst [vmem:[%s3 + $0x110] sm:$0xff] %v952
  %1124 = vst.msk [vmem:[%s3 + $0x118] sm:$0xff] %vm1089, %v954
  %1125 = vst [vmem:[%s3 + $0x120] sm:$0xff] %v958
  %1126 = vst.msk [vmem:[%s3 + $0x128] sm:$0xff] %vm1089, %v960
  %1127 = vst [vmem:[%s3 + $0x130] sm:$0xff] %v964
  %1128 = vst.msk [vmem:[%s3 + $0x138] sm:$0xff] %vm1089, %v966
  %1129 = vst [vmem:[%s3 + $0x140] sm:$0xff] %v970
  %1130 = vst.msk [vmem:[%s3 + $0x148] sm:$0xff] %vm1089, %v972
  %1131 = vst [vmem:[%s3 + $0x150] sm:$0xff] %v976
  %1132 = vst.msk [vmem:[%s3 + $0x158] sm:$0xff] %vm1089, %v978
  %1133 = vst [vmem:[%s3 + $0x160] sm:$0xff] %v982
  %1134 = vst.msk [vmem:[%s3 + $0x168] sm:$0xff] %vm1089, %v984
  %1135 = vst [vmem:[%s3 + $0x170] sm:$0xff] %v988
  %1136 = vst.msk [vmem:[%s3 + $0x178] sm:$0xff] %vm1089, %v990
  %1137 = vst [vmem:[%s3 + $0x180] sm:$0xff] %v994
  %1138 = vst.msk [vmem:[%s3 + $0x188] sm:$0xff] %vm1089, %v996
  %1139 = vst [vmem:[%s3 + $0x190] sm:$0xff] %v1000
  %1140 = vst.msk [vmem:[%s3 + $0x198] sm:$0xff] %vm1089, %v1002
  %1141 = vst [vmem:[%s3 + $0x1a0] sm:$0xff] %v1006
  %1142 = vst.msk [vmem:[%s3 + $0x1a8] sm:$0xff] %vm1089, %v1008
  %1143 = vst [vmem:[%s3 + $0x1b0] sm:$0xff] %v1012
  %1144 = vst.msk [vmem:[%s3 + $0x1b8] sm:$0xff] %vm1089, %v1014
  %1145 = vst [vmem:[%s3 + $0x1c0] sm:$0xff] %v1018
  %1146 = vst.msk [vmem:[%s3 + $0x1c8] sm:$0xff] %vm1089, %v1020
  %1147 = vst [vmem:[%s3 + $0x1d0] sm:$0xff] %v1024
  %1148 = vst.msk [vmem:[%s3 + $0x1d8] sm:$0xff] %vm1089, %v1026
  %1149 = vst [vmem:[%s3 + $0x1e0] sm:$0xff] %v1030
  %1150 = vst.msk [vmem:[%s3 + $0x1e8] sm:$0xff] %vm1089, %v1032
  %1151 = vst [vmem:[%s3 + $0x1f0] sm:$0xff] %v1036
  %1152 = vst.msk [vmem:[%s3 + $0x1f8] sm:$0xff] %vm1089, %v1038
  %1153 = vst [vmem:[%s3 + $0x200] sm:$0xff] %v1042
  %1154 = vst.msk [vmem:[%s3 + $0x208] sm:$0xff] %vm1089, %v1044
  %1155 = vst [vmem:[%s3 + $0x210] sm:$0xff] %v1048
  %1156 = vst.msk [vmem:[%s3 + $0x218] sm:$0xff] %vm1089, %v1050
  %1157 = vst [vmem:[%s3 + $0x220] sm:$0xff] %v1054
  %1158 = vst.msk [vmem:[%s3 + $0x228] sm:$0xff] %vm1089, %v1056
  %1159 = vst [vmem:[%s3 + $0x230] sm:$0xff] %v1060
  %1160 = vst.msk [vmem:[%s3 + $0x238] sm:$0xff] %vm1089, %v1062
  %1161 = vst [vmem:[%s3 + $0x240] sm:$0xff] %v1066
  %1162 = vst.msk [vmem:[%s3 + $0x248] sm:$0xff] %vm1089, %v1068
  %1163 = vst [vmem:[%s3 + $0x250] sm:$0xff] %v1072
  %1164 = vst.msk [vmem:[%s3 + $0x258] sm:$0xff] %vm1089, %v1074
  %1165 = vst [vmem:[%s3 + $0x260] sm:$0xff] %v1078
  %1166 = vst.msk [vmem:[%s3 + $0x268] sm:$0xff] %vm1089, %v1080
  %1167 = vst [vmem:[%s3 + $0x270] sm:$0xff] %v1084
  %1168 = vst.msk [vmem:[%s3 + $0x278] sm:$0xff] %vm1089, %v1086
  // Predicated region
  $region14: #{tpu_custom_call.1} parent=0 // pred_check
    _
  $region15: #{tpu_custom_call.1} parent=0 // pred_check_branch
    %1170 = sbr.rel (0) target = $region17
  $region16: #{tpu_custom_call.1} parent=0 // pred_region
    _
  $region17: #{tpu_custom_call.1} parent=0 // pred_fallthru
    _
  // Predicated region
  $region18: #{tpu_custom_call.1} parent=0 // pred_check
    _
  $region19: #{tpu_custom_call.1} parent=0 // pred_check_branch
    %1172 = sbr.rel (0) target = $region21
  $region20: #{tpu_custom_call.1} parent=0 // pred_region
    _
  $region21: #{tpu_custom_call.1} parent=0 // pred_fallthru
    _

</llo_original>
